<compile_context>
chip_gen: v7x
topology: tpu7x:2x2x1
jax: 0.10.0
libtpu: 0.0.40
codegen_flags: <defaults>
</compile_context>

<pallas_src>
import functools

import jax
import jax.numpy as jnp
import numpy as np
from jax.experimental import pallas as pl
from jax.experimental.pallas import tpu as pltpu

_THRESHOLD = 0.5
_BIG = 1e9


def _loss_kernel(logits_ref, labels_ref, attn_ref, boxes_ref, out_ref,
                 pmin_ref, pmax_ref, wmin_ref, wmax_ref,
                 *, w_dim, lane_tile, batch, num_boxes, lambda_weight):
    i = pl.program_id(0)
    nsteps = pl.num_programs(0)

    # ----------------- init accumulators -----------------
    @pl.when(i == 0)
    def _init():
        pmin_ref[...] = jnp.full((1, 1), _BIG, jnp.float32)
        pmax_ref[...] = jnp.full((1, 1), -_BIG, jnp.float32)
        wmin_ref[...] = jnp.full((1, 1), _BIG, jnp.float32)
        wmax_ref[...] = jnp.full((1, 1), -_BIG, jnp.float32)

    # ----------------- per-tile attention reduction (lane-dense) -----------------
    # Single full-tile pass: reduce raw values over the batch/sublane axis, then do all
    # masking + index math on a (1, lane_tile) vector.
    attn = attn_ref[...].astype(jnp.float32)                     # (B, T)
    col_max = jnp.max(attn, axis=0, keepdims=True)               # (1, T)
    col_any = col_max > _THRESHOLD                               # (1, T) any batch above thr

    lane = jax.lax.broadcasted_iota(jnp.int32, (1, lane_tile), 1)
    # flattened index p = h * W + w (same for every batch row); exact in f32 for H*W < 2^24
    p = (lane + i * lane_tile).astype(jnp.float32)               # (1, T)
    h_of = jnp.floor(p / w_dim)                                  # exact (correctly-rounded div)
    w_of = p - w_dim * h_of                                      # exact w per lane

    pmin_ref[...] = jnp.minimum(
        pmin_ref[...], jnp.min(jnp.where(col_any, p, _BIG), axis=1, keepdims=True))
    pmax_ref[...] = jnp.maximum(
        pmax_ref[...], jnp.max(jnp.where(col_any, p, -_BIG), axis=1, keepdims=True))
    wmin_ref[...] = jnp.minimum(
        wmin_ref[...], jnp.min(jnp.where(col_any, w_of, _BIG), axis=1, keepdims=True))
    wmax_ref[...] = jnp.maximum(
        wmax_ref[...], jnp.max(jnp.where(col_any, w_of, -_BIG), axis=1, keepdims=True))

    # ----------------- finalize: CE + IoU + combine -----------------
    @pl.when(i == nsteps - 1)
    def _finalize():
        p_min = pmin_ref[...]                                    # (1, 1)
        p_max = pmax_ref[...]
        w_min = wmin_ref[...]
        w_max = wmax_ref[...]
        has_any = p_min < _BIG
        # p is lexicographic in (h, w) => floor(min p / W) = min h, floor(max p / W) = max h.
        h_min = jnp.floor((p_min + 0.5) / w_dim)
        h_max = jnp.floor((p_max + 0.5) / w_dim)
        # empty-coords case -> zeros((1,4)), matching the PyTorch module
        x1 = jnp.where(has_any, h_min, 0.0)
        y1 = jnp.where(has_any, w_min, 0.0)
        x2 = jnp.where(has_any, h_max, 0.0)
        y2 = jnp.where(has_any, w_max, 0.0)

        # Cross-entropy (mean over batch), nn.CrossEntropyLoss semantics; f32 math in-kernel.
        logits = logits_ref[...].astype(jnp.float32)             # (B, C)
        labels = labels_ref[...]                                 # (B, 1) int32
        m = jnp.max(logits, axis=-1, keepdims=True)
        lse = m + jnp.log(jnp.sum(jnp.exp(logits - m), axis=-1, keepdims=True))
        onehot = jax.lax.broadcasted_iota(jnp.int32, logits.shape, 1) == labels
        picked = jnp.sum(jnp.where(onehot, logits, 0.0), axis=-1, keepdims=True)
        ce = jnp.sum(lse - picked, axis=0, keepdims=True) / batch       # (1, 1)

        # torchvision.ops.box_iou(pred (1,4), gt (M,4)).mean(); gt laid out as (4, M).
        gt = boxes_ref[...].astype(jnp.float32)                  # (4, M)
        gx1 = gt[0:1, :]
        gy1 = gt[1:2, :]
        gx2 = gt[2:3, :]
        gy2 = gt[3:4, :]
        area_p = (x2 - x1) * (y2 - y1)                           # (1, 1)
        area_g = (gx2 - gx1) * (gy2 - gy1)                       # (1, M)
        iw = jnp.maximum(jnp.minimum(x2, gx2) - jnp.maximum(x1, gx1), 0.0)
        ih = jnp.maximum(jnp.minimum(y2, gy2) - jnp.maximum(y1, gy1), 0.0)
        inter = iw * ih                                          # (1, M)
        iou = inter / (area_p + area_g - inter)                  # (1, M)
        iou_mean = jnp.sum(iou, axis=1, keepdims=True) / num_boxes
        out_ref[...] = ce + lambda_weight * (1.0 - iou_mean)


def attention_bbox_loss(logits, labels, attention_maps, bounding_boxes, lambda_weight=1.0):
    """Pallas implementation of AttentionBoundingBoxLoss.forward (attention_maps is not None)."""
    B, C = logits.shape
    _, H, W = attention_maps.shape
    M = bounding_boxes.shape[0]
    HW = H * W

    labels2d = labels.reshape(B, 1).astype(jnp.int32)
    boxes_t = jnp.transpose(bounding_boxes, (1, 0))              # (4, M): coords on sublanes

    # Lane-dense flatten; no dtype upcast (kernel casts internally).
    attn_flat = attention_maps.reshape(B, HW)

    # Lane-tile sizing: multiple of 128, no bigger than needed, and capped so a
    # double-buffered tile stays well inside every generation's scoped VMEM default
    # (v7x has only 64 MiB physical VMEM).
    itemsize = jnp.dtype(attention_maps.dtype).itemsize
    lane_tile = 2048
    max_by_vmem = max(128, (2 * 1024 * 1024) // (max(B, 8) * itemsize))   # ~2 MiB / buffer
    lane_tile = min(lane_tile, max_by_vmem)
    lane_tile = max(128, (lane_tile // 128) * 128)
    hw_128 = ((HW + 127) // 128) * 128
    lane_tile = min(lane_tile, hw_128)
    hw_pad = ((HW + lane_tile - 1) // lane_tile) * lane_tile
    if hw_pad != HW:
        attn_flat = jnp.pad(attn_flat, ((0, 0), (0, hw_pad - HW)))   # 0.0 <= threshold
    num_tiles = hw_pad // lane_tile

    kernel = functools.partial(
        _loss_kernel,
        w_dim=W,
        lane_tile=lane_tile,
        batch=B,
        num_boxes=M,
        lambda_weight=float(lambda_weight),
    )

    out = pl.pallas_call(
        kernel,
        out_shape=jax.ShapeDtypeStruct((1, 1), jnp.float32),
        grid_spec=pltpu.PrefetchScalarGridSpec(
            num_scalar_prefetch=0,
            grid=(num_tiles,),
            in_specs=[
                pl.BlockSpec((B, C), lambda i: (0, 0)),          # logits (resident)
                pl.BlockSpec((B, 1), lambda i: (0, 0)),          # labels (resident)
                pl.BlockSpec((B, lane_tile), lambda i: (0, i)),  # attention lane tile
                pl.BlockSpec((4, M), lambda i: (0, 0)),          # gt boxes (resident)
            ],
            out_specs=pl.BlockSpec((1, 1), lambda i: (0, 0)),
            scratch_shapes=[pltpu.VMEM((1, 1), jnp.float32)] * 4,
        ),
        compiler_params=pltpu.CompilerParams(
            dimension_semantics=("arbitrary",),
        ),
    )(logits, labels2d, attn_flat, boxes_t)
    return out[0, 0]


def _reference_loss(logits, labels, attention_maps, bounding_boxes, lambda_weight=1.0):
    """Pure-JAX reference mirroring the PyTorch module semantics."""
    logits = logits.astype(jnp.float32)
    lse = jax.scipy.special.logsumexp(logits, axis=-1)
    picked = logits[jnp.arange(logits.shape[0]), labels]
    ce = jnp.mean(lse - picked)

    attention_maps = attention_maps.astype(jnp.float32)
    mask = attention_maps > _THRESHOLD
    h_idx = jax.lax.broadcasted_iota(jnp.int32, attention_maps.shape, 1).astype(jnp.float32)
    w_idx = jax.lax.broadcasted_iota(jnp.int32, attention_maps.shape, 2).astype(jnp.float32)
    has_any = jnp.any(mask)
    x1 = jnp.where(has_any, jnp.min(jnp.where(mask, h_idx, _BIG)), 0.0)
    y1 = jnp.where(has_any, jnp.min(jnp.where(mask, w_idx, _BIG)), 0.0)
    x2 = jnp.where(has_any, jnp.max(jnp.where(mask, h_idx, -_BIG)), 0.0)
    y2 = jnp.where(has_any, jnp.max(jnp.where(mask, w_idx, -_BIG)), 0.0)

    gt = bounding_boxes.astype(jnp.float32)
    area_p = (x2 - x1) * (y2 - y1)
    area_g = (gt[:, 2] - gt[:, 0]) * (gt[:, 3] - gt[:, 1])
    iw = jnp.maximum(jnp.minimum(x2, gt[:, 2]) - jnp.maximum(x1, gt[:, 0]), 0.0)
    ih = jnp.maximum(jnp.minimum(y2, gt[:, 3]) - jnp.maximum(y1, gt[:, 1]), 0.0)
    inter = iw * ih
    iou = jnp.mean(inter / (area_p + area_g - inter))
    return ce + lambda_weight * (1.0 - iou)


if __name__ == "__main__":
    key = jax.random.PRNGKey(0)
    k1, k2, k3 = jax.random.split(key, 3)

    B, C, H, W, M = 2, 4, 16, 16, 2
    logits = jax.random.normal(k1, (B, C), dtype=jnp.float32)
    labels = jax.random.randint(k2, (B,), 0, C, dtype=jnp.int32)
    attention_maps = jax.random.uniform(k3, (B, H, W), dtype=jnp.float32)
    bounding_boxes = jnp.array([[2.0, 3.0, 10.0, 12.0],
                                [0.0, 0.0, 15.0, 15.0]], dtype=jnp.float32)

    total = attention_bbox_loss(logits, labels, attention_maps, bounding_boxes,
                                lambda_weight=1.0)
    total = jax.block_until_ready(total)

    ref = jax.block_until_ready(
        _reference_loss(logits, labels, attention_maps, bounding_boxes, lambda_weight=1.0))
    np.testing.assert_allclose(np.asarray(total), np.asarray(ref), rtol=1e-5, atol=1e-5)

    print("KERNEL_OK")
</pallas_src>

<mosaic_0001>
module attributes {stable_mosaic.version = 11 : i64} {
  func.func @_loss_kernel(%arg0: i32, %arg1: memref<2x4xf32, #tpu.memory_space<vmem>>, %arg2: memref<2x1xi32, #tpu.memory_space<vmem>>, %arg3: memref<2x256xf32, #tpu.memory_space<vmem>>, %arg4: memref<4x2xf32, #tpu.memory_space<vmem>>, %arg5: memref<1x1xf32, #tpu.memory_space<vmem>>, %arg6: memref<1x1xf32, #tpu.memory_space<vmem>>, %arg7: memref<1x1xf32, #tpu.memory_space<vmem>>, %arg8: memref<1x1xf32, #tpu.memory_space<vmem>>, %arg9: memref<1x1xf32, #tpu.memory_space<vmem>>) attributes {dimension_semantics = [#tpu.dimension_semantics<arbitrary>], iteration_bounds = array<i64: 1>, scalar_prefetch = 0 : i64, scratch_operands = 4 : i64, tpu.core_type = #tpu.core_type<tc>, window_params = [{pipeline_mode = #tpu.pipeline_mode<synchronous>, transform_indices = @transform_0, window_bounds = array<i64: 2, 4>}, {pipeline_mode = #tpu.pipeline_mode<synchronous>, transform_indices = @transform_1, window_bounds = array<i64: 2, 1>}, {transform_indices = @transform_2, window_bounds = array<i64: 2, 256>}, {pipeline_mode = #tpu.pipeline_mode<synchronous>, transform_indices = @transform_3, window_bounds = array<i64: 4, 2>}, {pipeline_mode = #tpu.pipeline_mode<synchronous>, transform_indices = @transform_4, window_bounds = array<i64: 1, 1>}]} {
    %c0_i32 = arith.constant 0 : i32
    %0 = arith.cmpi eq, %arg0, %c0_i32 : i32
    %1 = arith.extui %0 : i1 to i32
    %c0_i32_0 = arith.constant 0 : i32
    %2 = arith.cmpi ne, %1, %c0_i32_0 : i32
    scf.if %2 {
      %cst_31 = arith.constant 1.000000e+09 : f32
      %50 = vector.broadcast %cst_31 : f32 to vector<1x1xf32>
      %c0_32 = arith.constant 0 : index
      %c0_33 = arith.constant 0 : index
      %51 = vector.load %arg6[%c0_32, %c0_33] : memref<1x1xf32, #tpu.memory_space<vmem>>, vector<1x1xf32>
      tpu.vector_store %arg6[%c0_32, %c0_33], %50 {strides = array<i32>} : memref<1x1xf32, #tpu.memory_space<vmem>>, vector<1x1xf32>,
      %cst_34 = arith.constant -1.000000e+09 : f32
      %52 = vector.broadcast %cst_34 : f32 to vector<1x1xf32>
      %c0_35 = arith.constant 0 : index
      %c0_36 = arith.constant 0 : index
      %53 = vector.load %arg7[%c0_35, %c0_36] : memref<1x1xf32, #tpu.memory_space<vmem>>, vector<1x1xf32>
      tpu.vector_store %arg7[%c0_35, %c0_36], %52 {strides = array<i32>} : memref<1x1xf32, #tpu.memory_space<vmem>>, vector<1x1xf32>,
      %cst_37 = arith.constant 1.000000e+09 : f32
      %54 = vector.broadcast %cst_37 : f32 to vector<1x1xf32>
      %c0_38 = arith.constant 0 : index
      %c0_39 = arith.constant 0 : index
      %55 = vector.load %arg8[%c0_38, %c0_39] : memref<1x1xf32, #tpu.memory_space<vmem>>, vector<1x1xf32>
      tpu.vector_store %arg8[%c0_38, %c0_39], %54 {strides = array<i32>} : memref<1x1xf32, #tpu.memory_space<vmem>>, vector<1x1xf32>,
      %cst_40 = arith.constant -1.000000e+09 : f32
      %56 = vector.broadcast %cst_40 : f32 to vector<1x1xf32>
      %c0_41 = arith.constant 0 : index
      %c0_42 = arith.constant 0 : index
      %57 = vector.load %arg9[%c0_41, %c0_42] : memref<1x1xf32, #tpu.memory_space<vmem>>, vector<1x1xf32>
      tpu.vector_store %arg9[%c0_41, %c0_42], %56 {strides = array<i32>} : memref<1x1xf32, #tpu.memory_space<vmem>>, vector<1x1xf32>,
    } else {
    }
    %c0 = arith.constant 0 : index
    %c0_1 = arith.constant 0 : index
    %3 = vector.load %arg3[%c0, %c0_1] : memref<2x256xf32, #tpu.memory_space<vmem>>, vector<2x256xf32>
    %cst = arith.constant dense<0xFF800000> : vector<256xf32>
    %4 = vector.multi_reduction <maximumf>, %3, %cst [0] : vector<2x256xf32> to vector<256xf32>
    %5 = vector.shape_cast %4 : vector<256xf32> to vector<1x256xf32>
    %cst_2 = arith.constant 5.000000e-01 : f32
    %6 = vector.broadcast %cst_2 : f32 to vector<1x256xf32>
    %7 = arith.cmpf ogt, %5, %6 : vector<1x256xf32>
    %8 = tpu.iota {dimensions = array<i32: 1>} : vector<1x256xi32>
    %c256_i32 = arith.constant 256 : i32
    %9 = arith.muli %arg0, %c256_i32 : i32
    %10 = vector.broadcast %9 : i32 to vector<1x256xi32>
    %11 = arith.addi %8, %10 : vector<1x256xi32>
    %12 = arith.sitofp %11 : vector<1x256xi32> to vector<1x256xf32>
    %cst_3 = arith.constant 1.600000e+01 : f32
    %13 = vector.broadcast %cst_3 : f32 to vector<1x256xf32>
    %14 = arith.divf %12, %13 : vector<1x256xf32>
    %15 = math.floor %14 : vector<1x256xf32>
    %cst_4 = arith.constant 1.600000e+01 : f32
    %16 = vector.broadcast %cst_4 : f32 to vector<1x256xf32>
    %17 = arith.mulf %16, %15 : vector<1x256xf32>
    %18 = arith.subf %12, %17 : vector<1x256xf32>
    %c0_5 = arith.constant 0 : index
    %c0_6 = arith.constant 0 : index
    %19 = vector.load %arg6[%c0_5, %c0_6] : memref<1x1xf32, #tpu.memory_space<vmem>>, vector<1x1xf32>
    %cst_7 = arith.constant 1.000000e+09 : f32
    %20 = vector.broadcast %cst_7 : f32 to vector<1x256xf32>
    %21 = arith.select %7, %12, %20 : vector<1x256xi1>, vector<1x256xf32>
    %cst_8 = arith.constant dense<0x7F800000> : vector<1xf32>
    %22 = vector.multi_reduction <minimumf>, %21, %cst_8 [1] : vector<1x256xf32> to vector<1xf32>
    %23 = vector.shape_cast %22 : vector<1xf32> to vector<1x1xf32>
    %24 = arith.minimumf %19, %23 : vector<1x1xf32>
    %c0_9 = arith.constant 0 : index
    %c0_10 = arith.constant 0 : index
    %25 = vector.load %arg6[%c0_9, %c0_10] : memref<1x1xf32, #tpu.memory_space<vmem>>, vector<1x1xf32>
    tpu.vector_store %arg6[%c0_9, %c0_10], %24 {strides = array<i32>} : memref<1x1xf32, #tpu.memory_space<vmem>>, vector<1x1xf32>,
    %c0_11 = arith.constant 0 : index
    %c0_12 = arith.constant 0 : index
    %26 = vector.load %arg7[%c0_11, %c0_12] : memref<1x1xf32, #tpu.memory_space<vmem>>, vector<1x1xf32>
    %cst_13 = arith.constant -1.000000e+09 : f32
    %27 = vector.broadcast %cst_13 : f32 to vector<1x256xf32>
    %28 = arith.select %7, %12, %27 : vector<1x256xi1>, vector<1x256xf32>
    %cst_14 = arith.constant dense<0xFF800000> : vector<1xf32>
    %29 = vector.multi_reduction <maximumf>, %28, %cst_14 [1] : vector<1x256xf32> to vector<1xf32>
    %30 = vector.shape_cast %29 : vector<1xf32> to vector<1x1xf32>
    %31 = arith.maximumf %26, %30 : vector<1x1xf32>
    %c0_15 = arith.constant 0 : index
    %c0_16 = arith.constant 0 : index
    %32 = vector.load %arg7[%c0_15, %c0_16] : memref<1x1xf32, #tpu.memory_space<vmem>>, vector<1x1xf32>
    tpu.vector_store %arg7[%c0_15, %c0_16], %31 {strides = array<i32>} : memref<1x1xf32, #tpu.memory_space<vmem>>, vector<1x1xf32>,
    %c0_17 = arith.constant 0 : index
    %c0_18 = arith.constant 0 : index
    %33 = vector.load %arg8[%c0_17, %c0_18] : memref<1x1xf32, #tpu.memory_space<vmem>>, vector<1x1xf32>
    %cst_19 = arith.constant 1.000000e+09 : f32
    %34 = vector.broadcast %cst_19 : f32 to vector<1x256xf32>
    %35 = arith.select %7, %18, %34 : vector<1x256xi1>, vector<1x256xf32>
    %cst_20 = arith.constant dense<0x7F800000> : vector<1xf32>
    %36 = vector.multi_reduction <minimumf>, %35, %cst_20 [1] : vector<1x256xf32> to vector<1xf32>
    %37 = vector.shape_cast %36 : vector<1xf32> to vector<1x1xf32>
    %38 = arith.minimumf %33, %37 : vector<1x1xf32>
    %c0_21 = arith.constant 0 : index
    %c0_22 = arith.constant 0 : index
    %39 = vector.load %arg8[%c0_21, %c0_22] : memref<1x1xf32, #tpu.memory_space<vmem>>, vector<1x1xf32>
    tpu.vector_store %arg8[%c0_21, %c0_22], %38 {strides = array<i32>} : memref<1x1xf32, #tpu.memory_space<vmem>>, vector<1x1xf32>,
    %c0_23 = arith.constant 0 : index
    %c0_24 = arith.constant 0 : index
    %40 = vector.load %arg9[%c0_23, %c0_24] : memref<1x1xf32, #tpu.memory_space<vmem>>, vector<1x1xf32>
    %cst_25 = arith.constant -1.000000e+09 : f32
    %41 = vector.broadcast %cst_25 : f32 to vector<1x256xf32>
    %42 = arith.select %7, %18, %41 : vector<1x256xi1>, vector<1x256xf32>
    %cst_26 = arith.constant dense<0xFF800000> : vector<1xf32>
    %43 = vector.multi_reduction <maximumf>, %42, %cst_26 [1] : vector<1x256xf32> to vector<1xf32>
    %44 = vector.shape_cast %43 : vector<1xf32> to vector<1x1xf32>
    %45 = arith.maximumf %40, %44 : vector<1x1xf32>
    %c0_27 = arith.constant 0 : index
    %c0_28 = arith.constant 0 : index
    %46 = vector.load %arg9[%c0_27, %c0_28] : memref<1x1xf32, #tpu.memory_space<vmem>>, vector<1x1xf32>
    tpu.vector_store %arg9[%c0_27, %c0_28], %45 {strides = array<i32>} : memref<1x1xf32, #tpu.memory_space<vmem>>, vector<1x1xf32>,
    %c0_i32_29 = arith.constant 0 : i32
    %47 = arith.cmpi eq, %arg0, %c0_i32_29 : i32
    %48 = arith.extui %47 : i1 to i32
    %c0_i32_30 = arith.constant 0 : i32
    %49 = arith.cmpi ne, %48, %c0_i32_30 : i32
    scf.if %49 {
      %c0_31 = arith.constant 0 : index
      %c0_32 = arith.constant 0 : index
      %50 = vector.load %arg6[%c0_31, %c0_32] : memref<1x1xf32, #tpu.memory_space<vmem>>, vector<1x1xf32>
      %c0_33 = arith.constant 0 : index
      %c0_34 = arith.constant 0 : index
      %51 = vector.load %arg7[%c0_33, %c0_34] : memref<1x1xf32, #tpu.memory_space<vmem>>, vector<1x1xf32>
      %c0_35 = arith.constant 0 : index
      %c0_36 = arith.constant 0 : index
      %52 = vector.load %arg8[%c0_35, %c0_36] : memref<1x1xf32, #tpu.memory_space<vmem>>, vector<1x1xf32>
      %c0_37 = arith.constant 0 : index
      %c0_38 = arith.constant 0 : index
      %53 = vector.load %arg9[%c0_37, %c0_38] : memref<1x1xf32, #tpu.memory_space<vmem>>, vector<1x1xf32>
      %cst_39 = arith.constant 1.000000e+09 : f32
      %54 = vector.broadcast %cst_39 : f32 to vector<1x1xf32>
      %55 = arith.cmpf olt, %50, %54 : vector<1x1xf32>
      %cst_40 = arith.constant 5.000000e-01 : f32
      %56 = vector.broadcast %cst_40 : f32 to vector<1x1xf32>
      %57 = arith.addf %50, %56 : vector<1x1xf32>
      %cst_41 = arith.constant 1.600000e+01 : f32
      %58 = vector.broadcast %cst_41 : f32 to vector<1x1xf32>
      %59 = arith.divf %57, %58 : vector<1x1xf32>
      %60 = math.floor %59 : vector<1x1xf32>
      %cst_42 = arith.constant 5.000000e-01 : f32
      %61 = vector.broadcast %cst_42 : f32 to vector<1x1xf32>
      %62 = arith.addf %51, %61 : vector<1x1xf32>
      %cst_43 = arith.constant 1.600000e+01 : f32
      %63 = vector.broadcast %cst_43 : f32 to vector<1x1xf32>
      %64 = arith.divf %62, %63 : vector<1x1xf32>
      %65 = math.floor %64 : vector<1x1xf32>
      %cst_44 = arith.constant 0.000000e+00 : f32
      %66 = vector.broadcast %cst_44 : f32 to vector<1x1xf32>
      %67 = arith.select %55, %60, %66 : vector<1x1xi1>, vector<1x1xf32>
      %cst_45 = arith.constant 0.000000e+00 : f32
      %68 = vector.broadcast %cst_45 : f32 to vector<1x1xf32>
      %69 = arith.select %55, %52, %68 : vector<1x1xi1>, vector<1x1xf32>
      %cst_46 = arith.constant 0.000000e+00 : f32
      %70 = vector.broadcast %cst_46 : f32 to vector<1x1xf32>
      %71 = arith.select %55, %65, %70 : vector<1x1xi1>, vector<1x1xf32>
      %cst_47 = arith.constant 0.000000e+00 : f32
      %72 = vector.broadcast %cst_47 : f32 to vector<1x1xf32>
      %73 = arith.select %55, %53, %72 : vector<1x1xi1>, vector<1x1xf32>
      %c0_48 = arith.constant 0 : index
      %c0_49 = arith.constant 0 : index
      %74 = vector.load %arg1[%c0_48, %c0_49] : memref<2x4xf32, #tpu.memory_space<vmem>>, vector<2x4xf32>
      %c0_50 = arith.constant 0 : index
      %c0_51 = arith.constant 0 : index
      %75 = vector.load %arg2[%c0_50, %c0_51] : memref<2x1xi32, #tpu.memory_space<vmem>>, vector<2x1xi32>
      %cst_52 = arith.constant dense<0xFF800000> : vector<2xf32>
      %76 = vector.multi_reduction <maximumf>, %74, %cst_52 [1] : vector<2x4xf32> to vector<2xf32>
      %77 = vector.shape_cast %76 : vector<2xf32> to vector<2x1xf32>
      %78 = vector.broadcast %77 : vector<2x1xf32> to vector<2x4xf32>
      %79 = arith.subf %74, %78 : vector<2x4xf32>
      %80 = math.exp %79 : vector<2x4xf32>
      %cst_53 = arith.constant dense<0.000000e+00> : vector<2xf32>
      %81 = vector.multi_reduction <add>, %80, %cst_53 [1] : vector<2x4xf32> to vector<2xf32>
      %82 = vector.shape_cast %81 : vector<2xf32> to vector<2x1xf32>
      %83 = math.log %82 : vector<2x1xf32>
      %84 = arith.addf %77, %83 : vector<2x1xf32>
      %85 = tpu.iota {dimensions = array<i32: 1>} : vector<2x4xi32>
      %86 = vector.broadcast %75 : vector<2x1xi32> to vector<2x4xi32>
      %87 = arith.cmpi eq, %85, %86 : vector<2x4xi32>
      %cst_54 = arith.constant 0.000000e+00 : f32
      %88 = vector.broadcast %cst_54 : f32 to vector<2x4xf32>
      %89 = arith.select %87, %74, %88 : vector<2x4xi1>, vector<2x4xf32>
      %cst_55 = arith.constant dense<0.000000e+00> : vector<2xf32>
      %90 = vector.multi_reduction <add>, %89, %cst_55 [1] : vector<2x4xf32> to vector<2xf32>
      %91 = vector.shape_cast %90 : vector<2xf32> to vector<2x1xf32>
      %92 = arith.subf %84, %91 : vector<2x1xf32>
      %cst_56 = arith.constant dense<0.000000e+00> : vector<1xf32>
      %93 = vector.multi_reduction <add>, %92, %cst_56 [0] : vector<2x1xf32> to vector<1xf32>
      %94 = vector.shape_cast %93 : vector<1xf32> to vector<1x1xf32>
      %cst_57 = arith.constant 2.000000e+00 : f32
      %95 = vector.broadcast %cst_57 : f32 to vector<1x1xf32>
      %96 = arith.divf %94, %95 : vector<1x1xf32>
      %c0_58 = arith.constant 0 : index
      %c0_59 = arith.constant 0 : index
      %97 = vector.load %arg4[%c0_58, %c0_59] : memref<4x2xf32, #tpu.memory_space<vmem>>, vector<4x2xf32>
      %98 = vector.extract_strided_slice %97 {offsets = [0, 0], sizes = [1, 2], strides = [1, 1]} : vector<4x2xf32> to vector<1x2xf32>
      %99 = vector.extract_strided_slice %97 {offsets = [1, 0], sizes = [1, 2], strides = [1, 1]} : vector<4x2xf32> to vector<1x2xf32>
      %100 = vector.extract_strided_slice %97 {offsets = [2, 0], sizes = [1, 2], strides = [1, 1]} : vector<4x2xf32> to vector<1x2xf32>
      %101 = vector.extract_strided_slice %97 {offsets = [3, 0], sizes = [1, 2], strides = [1, 1]} : vector<4x2xf32> to vector<1x2xf32>
      %102 = arith.subf %71, %67 : vector<1x1xf32>
      %103 = arith.subf %73, %69 : vector<1x1xf32>
      %104 = arith.mulf %102, %103 : vector<1x1xf32>
      %105 = arith.subf %100, %98 : vector<1x2xf32>
      %106 = arith.subf %101, %99 : vector<1x2xf32>
      %107 = arith.mulf %105, %106 : vector<1x2xf32>
      %108 = vector.broadcast %71 : vector<1x1xf32> to vector<1x2xf32>
      %109 = arith.minimumf %108, %100 : vector<1x2xf32>
      %110 = vector.broadcast %67 : vector<1x1xf32> to vector<1x2xf32>
      %111 = arith.maximumf %110, %98 : vector<1x2xf32>
      %112 = arith.subf %109, %111 : vector<1x2xf32>
      %cst_60 = arith.constant 0.000000e+00 : f32
      %113 = vector.broadcast %cst_60 : f32 to vector<1x2xf32>
      %114 = arith.maximumf %112, %113 : vector<1x2xf32>
      %115 = vector.broadcast %73 : vector<1x1xf32> to vector<1x2xf32>
      %116 = arith.minimumf %115, %101 : vector<1x2xf32>
      %117 = vector.broadcast %69 : vector<1x1xf32> to vector<1x2xf32>
      %118 = arith.maximumf %117, %99 : vector<1x2xf32>
      %119 = arith.subf %116, %118 : vector<1x2xf32>
      %cst_61 = arith.constant 0.000000e+00 : f32
      %120 = vector.broadcast %cst_61 : f32 to vector<1x2xf32>
      %121 = arith.maximumf %119, %120 : vector<1x2xf32>
      %122 = arith.mulf %114, %121 : vector<1x2xf32>
      %123 = vector.broadcast %104 : vector<1x1xf32> to vector<1x2xf32>
      %124 = arith.addf %123, %107 : vector<1x2xf32>
      %125 = arith.subf %124, %122 : vector<1x2xf32>
      %126 = arith.divf %122, %125 : vector<1x2xf32>
      %cst_62 = arith.constant dense<0.000000e+00> : vector<1xf32>
      %127 = vector.multi_reduction <add>, %126, %cst_62 [1] : vector<1x2xf32> to vector<1xf32>
      %128 = vector.shape_cast %127 : vector<1xf32> to vector<1x1xf32>
      %cst_63 = arith.constant 2.000000e+00 : f32
      %129 = vector.broadcast %cst_63 : f32 to vector<1x1xf32>
      %130 = arith.divf %128, %129 : vector<1x1xf32>
      %cst_64 = arith.constant 1.000000e+00 : f32
      %131 = vector.broadcast %cst_64 : f32 to vector<1x1xf32>
      %132 = arith.subf %131, %130 : vector<1x1xf32>
      %cst_65 = arith.constant 1.000000e+00 : f32
      %133 = vector.broadcast %cst_65 : f32 to vector<1x1xf32>
      %134 = arith.mulf %133, %132 : vector<1x1xf32>
      %135 = arith.addf %96, %134 : vector<1x1xf32>
      %c0_66 = arith.constant 0 : index
      %c0_67 = arith.constant 0 : index
      %136 = vector.load %arg5[%c0_66, %c0_67] : memref<1x1xf32, #tpu.memory_space<vmem>>, vector<1x1xf32>
      tpu.vector_store %arg5[%c0_66, %c0_67], %135 {strides = array<i32>} : memref<1x1xf32, #tpu.memory_space<vmem>>, vector<1x1xf32>,
    } else {
    }
    return
  }
  func.func @transform_0(%arg0: i32) -> (i32, i32) {
    %c0_i32 = arith.constant 0 : i32
    %c0_i32_0 = arith.constant 0 : i32
    %c0_i32_1 = arith.constant 0 : i32
    return %c0_i32, %c0_i32_0 : i32, i32
  }
  func.func @transform_1(%arg0: i32) -> (i32, i32) {
    %c0_i32 = arith.constant 0 : i32
    %c0_i32_0 = arith.constant 0 : i32
    %c0_i32_1 = arith.constant 0 : i32
    return %c0_i32, %c0_i32_0 : i32, i32
  }
  func.func @transform_2(%arg0: i32) -> (i32, i32) {
    %c0_i32 = arith.constant 0 : i32
    %c0_i32_0 = arith.constant 0 : i32
    return %c0_i32, %arg0 : i32, i32
  }
  func.func @transform_3(%arg0: i32) -> (i32, i32) {
    %c0_i32 = arith.constant 0 : i32
    %c0_i32_0 = arith.constant 0 : i32
    %c0_i32_1 = arith.constant 0 : i32
    return %c0_i32, %c0_i32_0 : i32, i32
  }
  func.func @transform_4(%arg0: i32) -> (i32, i32) {
    %c0_i32 = arith.constant 0 : i32
    %c0_i32_0 = arith.constant 0 : i32
    %c0_i32_1 = arith.constant 0 : i32
    return %c0_i32, %c0_i32_0 : i32, i32
  }
}

</mosaic_0001>

<llo_original>
// kernel: tpu_custom_call.1
$region0: #{tpu_custom_call.1}
  #allocation0 [shape = 'u32[]', space=smem, size = 0x4, offset = 0x4, fixed_abs, tag = 'smem constant byte address 0x4 - core index']
  #allocation1 [shape = 'u32[144,128]{1,0:T(1,128)}', space=vmem, size = 0x12000, scoped, tag = 'internal scratch']
  #allocation2 [shape = 'f32[1,1]{1,0:T(1,128)}', space=vmem, size = 0x200, scoped, tag = 'scratch operand']
  #allocation3 [shape = 'f32[1,1]{1,0:T(1,128)}', space=vmem, size = 0x200, scoped, tag = 'scratch operand']
  #allocation4 [shape = 'f32[1,1]{1,0:T(1,128)}', space=vmem, size = 0x200, scoped, tag = 'scratch operand']
  #allocation5 [shape = 'f32[1,1]{1,0:T(1,128)}', space=vmem, size = 0x200, scoped, tag = 'scratch operand']
  %s0 = inlined_call_operand.vmem [shape: f32[2,4], index: 0, kind: input, shape index: {}]
  %s1 = inlined_call_operand.vmem [shape: s32[2,1], index: 1, kind: input, shape index: {}]
  %s2 = inlined_call_operand.vmem [shape: f32[2,256], index: 2, kind: input, shape index: {}]
  %s3 = inlined_call_operand.vmem [shape: f32[4,2], index: 3, kind: input, shape index: {}]
  %s4 = inlined_call_operand.hbm [shape: f32[1,1], index: 4, kind: output, shape index: {}]
  %s5 = sld [smem:[#allocation0]]
  $region34: #{tpu_custom_call.1} parent=0
    _
  %s7 = ssub.s32 1, %s5
  %s8 = scalar_select 0, %s7, %s5
  $region1: #{tpu_custom_call.1} parent=0
    #allocation6 [shape = 'u8[512]{0}', space=vmem, size = 0x400, scoped, tag = 'output window, operand 0, single buffered']
    #allocation7 [shape = 's32[1]{0}', space=sflag, size = 0x4, scoped, tag = 'scoped memory for tpu_custom_call.1']
    %9 = vsyncpa [#allocation7], 0
    // Predicated region
    $region2: #{tpu_custom_call.1} parent=1 // pred_check
      _
    $region3: #{tpu_custom_call.1} parent=1 // pred_check_branch
      %11 = sbr.rel (0) target = $region5
    $region4: #{tpu_custom_call.1} parent=1 // pred_region
      _
    $region5: #{tpu_custom_call.1} parent=1 // pred_fallthru
      _
    // Predicated region
    $region6: #{tpu_custom_call.1} parent=1 // pred_check
      _
    $region7: #{tpu_custom_call.1} parent=1 // pred_check_branch
      %13 = sbr.rel (0) target = $region9
    $region8: #{tpu_custom_call.1} parent=1 // pred_region
      _
    $region9: #{tpu_custom_call.1} parent=1 // pred_fallthru
      _
    // Predicated region
    $region10: #{tpu_custom_call.1} parent=1 // pred_check
      _
    $region11: #{tpu_custom_call.1} parent=1 // pred_check_branch
      %15 = sbr.rel (0) target = $region13
    $region12: #{tpu_custom_call.1} parent=1 // pred_region
      _
    $region13: #{tpu_custom_call.1} parent=1 // pred_fallthru
      _
    // Predicated region
    $region14: #{tpu_custom_call.1} parent=1 // pred_check
      _
    $region15: #{tpu_custom_call.1} parent=1 // pred_check_branch
      %17 = sbr.rel (0) target = $region17
    $region16: #{tpu_custom_call.1} parent=1 // pred_region
      _
    $region17: #{tpu_custom_call.1} parent=1 // pred_fallthru
      _
    %p18 = scmp.eq.s32.totalorder 0, 0
    // Predicated region
    $region18: #{tpu_custom_call.1} parent=1 // pred_check
      %p19 = pneg %p18
    $region19: #{tpu_custom_call.1} parent=1 // pred_check_branch
      %21 = sbr.rel (%p19) target = $region21
    $region20: #{tpu_custom_call.1} parent=1 // pred_region
      %vm22 = vcmask 0
      %23 = vst.msk [vmem:[#allocation2] sm:$0x1] %vm22, 1e+09
      %24 = vst.msk [vmem:[#allocation3] sm:$0x1] %vm22, -1e+09
      %25 = vst.msk [vmem:[#allocation4] sm:$0x1] %vm22, 1e+09
      %26 = vst.msk [vmem:[#allocation5] sm:$0x1] %vm22, -1e+09
    $region21: #{tpu_custom_call.1} parent=1 // pred_fallthru
      _
    %v27 = vld [vmem:[%s2] sm:$0xf]
    %v30 = vunpack.c.l.s4 1983009808
    %v31 = vunpack.c.0.s8 %v30
    %v32 = vlaneseq
    %v33 = vshrl.u32 %v32, 7
    %v34 = vsub.s32 %v31, %v33
    %v35 = vrot.slane %v27, %v34
    %v36 = vcombine.high %v35, %v35
    %vm39 = vcmask 1041408
    %v40 = vsel %vm39, %v35, -inf
    %v41 = vrot.slane %v40, 4
    %v42 = vmax.f32 %v40, %v41
    %v43 = vrot.slane %v42, 2
    %v44 = vmax.f32 %v42, %v43
    %v45 = vrot.slane %v44, 1
    %v46 = vmax.f32 %v44, %v45
    %v47 = vsel %vm39, %v36, -inf
    %v48 = vrot.slane %v47, 4
    %v49 = vmax.f32 %v47, %v48
    %v50 = vrot.slane %v49, 2
    %v51 = vmax.f32 %v49, %v50
    %v52 = vrot.slane %v51, 1
    %v53 = vmax.f32 %v51, %v52
    %vm54 = vcmp.gt.f32.partialorder %v46, 0.5
    %vm55 = vcmp.gt.f32.partialorder %v53, 0.5
    %v56 = vlaneseq
    %v57 = vand.u32 %v56, 127
    %v58 = vadd.s32 %v57, 128
    %s59 = smul.u32 0, 256
    %v60 = vstv %s59
    %v61 = vadd.s32 %v57, %v60
    %v62 = vadd.s32 %v58, %v60
    %v63 = vcvt.s32.f32 %v61
    %v64 = vcvt.s32.f32 %v62
    %v65 = vrcp.pop 16.0
    %v66 = vmul.f32 %v63, %v65
    %v67 = vmul.f32 %v64, %v65
    %v68 = vfloor.f32 %v66
    %v69 = vfloor.f32 %v67
    %v70 = vmul.f32 %v68, 16.0
    %v71 = vmul.f32 %v69, 16.0
    %v72 = vsub.f32 %v63, %v70
    %v73 = vsub.f32 %v64, %v71
    %v74 = vld [vmem:[#allocation2] sm:$0x1]
    %v75 = vsel %vm54, %v63, 1e+09
    %v76 = vsel %vm55, %v64, 1e+09
    %v77 = vmin.f32 %v75, %v76
    %78 = vmin.xlane.f32.xlu0 %v77
    %v79 = vpop.xlane.xlu0 %78
    %v80 = vmin.f32 %v74, %v79
    %vm81 = vcmask 0
    %82 = vst.msk [vmem:[#allocation2] sm:$0x1] %vm81, %v80
    %v83 = vld [vmem:[#allocation3] sm:$0x1]
    %v84 = vsel %vm54, %v63, -1e+09
    %v85 = vsel %vm55, %v64, -1e+09
    %v86 = vmax.f32 %v84, %v85
    %87 = vmax.xlane.f32.xlu0 %v86
    %v88 = vpop.xlane.xlu0 %87
    %v89 = vmax.f32 %v83, %v88
    %90 = vst.msk [vmem:[#allocation3] sm:$0x1] %vm81, %v89
    %v91 = vld [vmem:[#allocation4] sm:$0x1]
    %v92 = vsel %vm54, %v72, 1e+09
    %v93 = vsel %vm55, %v73, 1e+09
    %v94 = vmin.f32 %v92, %v93
    %95 = vmin.xlane.f32.xlu0 %v94
    %v96 = vpop.xlane.xlu0 %95
    %v97 = vmin.f32 %v91, %v96
    %98 = vst.msk [vmem:[#allocation4] sm:$0x1] %vm81, %v97
    %v99 = vld [vmem:[#allocation5] sm:$0x1]
    %v100 = vsel %vm54, %v72, -1e+09
    %v101 = vsel %vm55, %v73, -1e+09
    %v102 = vmax.f32 %v100, %v101
    %103 = vmax.xlane.f32.xlu0 %v102
    %v104 = vpop.xlane.xlu0 %103
    %v105 = vmax.f32 %v99, %v104
    %106 = vst.msk [vmem:[#allocation5] sm:$0x1] %vm81, %v105
    // Predicated region
    $region22: #{tpu_custom_call.1} parent=1 // pred_check
      %p107 = pneg %p18
    $region23: #{tpu_custom_call.1} parent=1 // pred_check_branch
      %109 = sbr.rel (%p107) target = $region25
    $region24: #{tpu_custom_call.1} parent=1 // pred_region
      %v110 = vld [vmem:[#allocation2] sm:$0x1]
      %v111 = vld [vmem:[#allocation3] sm:$0x1]
      %v112 = vld [vmem:[#allocation4] sm:$0x1]
      %v113 = vld [vmem:[#allocation5] sm:$0x1]
      %vm114 = vcmp.lt.f32.partialorder %v110, 1e+09
      %v115 = vadd.f32 %v110, 0.5
      %v116 = vmul.f32 %v115, %v65
      %v117 = vfloor.f32 %v116
      %v118 = vadd.f32 %v111, 0.5
      %v119 = vmul.f32 %v118, %v65
      %v120 = vfloor.f32 %v119
      %v121 = vsel %vm114, %v117, 0.0
      %v122 = vsel %vm114, %v112, 0.0
      %v123 = vsel %vm114, %v120, 0.0
      %v124 = vsel %vm114, %v113, 0.0
      %v125 = vld [vmem:[%s0] sm:$0x3]
      %v126 = vld [vmem:[%s1] sm:$0x3]
      %vm127 = vcmask 25600
      %v128 = vsel %vm127, %v125, -inf
      %129 = vmax.xlane.f32.xlu0 %v128
      %v130 = vpop.xlane.xlu0 %129
      %v131 = vsub.f32 %v125, %v130
      %v132 = vmul.f32 %v131, 1.442695
      %v133 = vpow.pop %v132
      %v134 = vsel %vm127, %v133, 0.0
      %135 = vadd.xlane.f32.xlu0 %v134
      %v136 = vpop.xlane.xlu0 %135
      %v137 = vlog2.pop %v136
      %v138 = vmul.f32 %v137, 0.6931472
      %v139 = vadd.f32 %v130, %v138
      %140 = vset.pattern.permute.xlu0 0
      %141 = vperm.xlu0 %140, %v126
      %v142 = vpop.permute.xlu0 %141
      %vm143 = vcmp.eq.s32.totalorder %v57, %v142
      %v144 = vsel %vm143, %v125, 0.0
      %v145 = vsel %vm127, %v144, 0.0
      %146 = vadd.xlane.f32.xlu0 %v145
      %v147 = vpop.xlane.xlu0 %146
      %v148 = vsub.f32 %v139, %v147
      %v149 = vsel %vm39, %v148, 0.0
      %v150 = vrot.slane %v149, 4
      %v151 = vadd.f32 %v149, %v150
      %v152 = vrot.slane %v151, 2
      %v153 = vadd.f32 %v151, %v152
      %v154 = vrot.slane %v153, 1
      %v155 = vadd.f32 %v153, %v154
      %v156 = vrcp.pop 2.0
      %v157 = vmul.f32 %v155, %v156
      %v158 = vld [vmem:[%s3] sm:$0xf]
      %v159 = vsub.f32 %v123, %v121
      %v160 = vsub.f32 %v124, %v122
      %v161 = vmul.f32 %v159, %v160
      %v163 = vrot.slane %v158, 6
      %v165 = vsub.f32 %v158, %v163
      %v167 = vrot.slane %v165, 1
      %v169 = vmul.f32 %v165, %v167
      %171 = vset.pattern.permute.xlu0 0
      %172 = vperm.xlu0 %171, %v123
      %v173 = vpop.permute.xlu0 %172
      %v175 = vlaneseq
      %v176 = vshrl.u32 %v175, 7
      %v177 = vsub.s32 0, %v176
      %v178 = vrot.slane %v173, %v177
      %v179 = vmin.f32 %v178, %v158
      %181 = vset.pattern.permute.xlu0 0
      %182 = vperm.xlu0 %181, %v121
      %v183 = vpop.permute.xlu0 %182
      %v185 = vlaneseq
      %v186 = vshrl.u32 %v185, 7
      %v187 = vsub.s32 0, %v186
      %v188 = vrot.slane %v183, %v187
      %v189 = vmax.f32 %v188, %v158
      %v191 = vrot.slane %v189, 6
      %v193 = vsub.f32 %v179, %v191
      %v194 = vmax.f32 %v193, 0.0
      %196 = vset.pattern.permute.xlu0 0
      %197 = vperm.xlu0 %196, %v124
      %v198 = vpop.permute.xlu0 %197
      %v200 = vlaneseq
      %v201 = vshrl.u32 %v200, 7
      %v202 = vsub.s32 0, %v201
      %v203 = vrot.slane %v198, %v202
      %v204 = vmin.f32 %v203, %v158
      %206 = vset.pattern.permute.xlu0 0
      %207 = vperm.xlu0 %206, %v122
      %v208 = vpop.permute.xlu0 %207
      %v210 = vlaneseq
      %v211 = vshrl.u32 %v210, 7
      %v212 = vsub.s32 0, %v211
      %v213 = vrot.slane %v208, %v212
      %v214 = vmax.f32 %v213, %v158
      %v216 = vrot.slane %v214, 6
      %v218 = vsub.f32 %v204, %v216
      %v219 = vmax.f32 %v218, 0.0
      %v221 = vrot.slane %v219, 1
      %v223 = vmul.f32 %v194, %v221
      %225 = vset.pattern.permute.xlu0 0
      %226 = vperm.xlu0 %225, %v161
      %v227 = vpop.permute.xlu0 %226
      %v229 = vlaneseq
      %v230 = vshrl.u32 %v229, 7
      %v231 = vsub.s32 0, %v230
      %v232 = vrot.slane %v227, %v231
      %v233 = vadd.f32 %v232, %v169
      %v234 = vsub.f32 %v233, %v223
      %v235 = vrcp.pop %v234
      %v236 = vmul.f32 %v223, %v235
      %vm237 = vcmask 10242
      %v238 = vsel %vm237, %v236, 0.0
      %239 = vadd.xlane.f32.xlu0 %v238
      %v240 = vpop.xlane.xlu0 %239
      %v241 = vmul.f32 %v240, %v156
      %v242 = vsub.f32 1.0, %v241
      %v243 = vadd.f32 %v157, %v242
      %vm244 = vcmask 2050
      %245 = vst.msk [vmem:[#allocation6 - $0x2] sm:$0x4] %vm244, %v243
    $region25: #{tpu_custom_call.1} parent=1 // pred_fallthru
      _
    // Predicated region
    $region26: #{tpu_custom_call.1} parent=1 // pred_check
      _
    $region27: #{tpu_custom_call.1} parent=1 // pred_check_branch
      %247 = sbr.rel (0) target = $region29
    $region28: #{tpu_custom_call.1} parent=1 // pred_region
      %s249 = ssub.s32 16, 16
      %250 = vsyncadd [#allocation7], %s249
      %s252 = sshll.u32 [#allocation6], 4
      %s253 = int_to_ptr.vmem [resolvable:$true] %s252
      %255 = dma.vmem_to_hbm [thread:$0]  %s253, 16, %s4, [#allocation7]
    $region29: #{tpu_custom_call.1} parent=1 // pred_fallthru
      _
    // Predicated region
    $region30: #{tpu_custom_call.1} parent=1 // pred_check
      _
    $region31: #{tpu_custom_call.1} parent=1 // pred_check_branch
      %257 = sbr.rel (0) target = $region33
    $region32: #{tpu_custom_call.1} parent=1 // pred_region
      %258 = dma.done [#allocation7], 16
    $region33: #{tpu_custom_call.1} parent=1 // pred_fallthru
      _
    %259 = vsyncpa [#allocation7], 1

</llo_original>
